<compile_context>
chip_gen: v7x
topology: tpu7x:2x2x1
jax: 0.10.0
libtpu: 0.0.40
codegen_flags: <defaults>
</compile_context>

<pallas_src>
import jax
import jax.numpy as jnp
from jax.experimental import pallas as pl
from jax.experimental.pallas import tpu as pltpu


def _round_up(n, m):
    return ((n + m - 1) // m) * m


def _tadn_kernel(x_ref, w_ref, sc_ref, sh_ref, cw_ref, cb_ref,
                 out_ref, emb_ref):
    tb, hw, kp = x_ref.shape
    ep = w_ref.shape[1]

    # Single fused MXU matmul: 3x3 conv over all TB*HW pixels with
    # K = 9*C (+1 ones-lane carrying the conv bias), padded to 128 lanes.
    x2d = x_ref[...].reshape(tb * hw, kp)
    y = jnp.dot(x2d, w_ref[...], preferred_element_type=jnp.float32)
    y = jnp.maximum(y, 0.0)                                   # ReLU

    # AdaptiveAvgPool2d((1,1)): mean over HW.  The BatchNorm affine is linear
    # and commutes with the mean, so it is applied on the pooled (TB, E)
    # tensor instead of the full (TB*HW, E) tensor.
    pooled = jnp.sum(y.reshape(tb, hw, ep), axis=1) * (1.0 / hw)
    emb = pooled * sc_ref[...] + sh_ref[...]                  # BN (eval, folded)
    emb_ref[...] = emb.astype(emb_ref.dtype)

    # 1x1 classifier conv on the pooled embedding: one (TB, E) x (E, NC)
    # matmul per grid step (E/NC zero-padded to 128 -> lane-dense output).
    logits = jnp.dot(emb, cw_ref[...],
                     preferred_element_type=jnp.float32) + cb_ref[...]
    out_ref[...] = logits.astype(out_ref.dtype)


def tadn_classifier_forward(x_nchw, params, eps=1e-5, batch_block=8):
    conv_w, conv_b, gamma, beta, mean, var, cls_w, cls_b = params
    B, C, H, W = x_nchw.shape
    E = conv_w.shape[0]
    NC = cls_w.shape[0]
    HW = H * W
    K = 9 * C                                   # fused im2col contraction dim
    KP = _round_up(K + 1, 128)                  # +1 ones-lane for folded bias
    EP = _round_up(E, 128)
    NP = _round_up(NC, 128)

    TB = min(batch_block, B)
    BP = _round_up(B, TB)

    # --- Glue (layout plumbing only) -------------------------------------
    # Lane-dense im2col: NCHW -> NHWC, zero-pad spatially, concatenate the
    # nine 3x3 taps on the channel (lane) axis, append the ones-lane and
    # zero-pad lanes up to KP = 128.
    x_nhwc = jnp.transpose(x_nchw, (0, 2, 3, 1))
    x_pad = jnp.pad(x_nhwc, ((0, 0), (1, 1), (1, 1), (0, 0)))
    taps = [x_pad[:, dy:dy + H, dx:dx + W, :]
            for dy in range(3) for dx in range(3)]
    x_im2col = jnp.concatenate(taps, axis=-1).reshape(B, HW, K)     # (B,HW,9C)
    x_packed = jnp.concatenate(
        [x_im2col,
         jnp.ones((B, HW, 1), x_im2col.dtype),                      # bias lane
         jnp.zeros((B, HW, KP - K - 1), x_im2col.dtype)], axis=-1)  # (B,HW,KP)
    if BP != B:
        x_packed = jnp.pad(x_packed, ((0, BP - B), (0, 0), (0, 0)))

    # Conv weight (E,C,3,3) -> (9*C, E), tap-major to match x packing, with
    # the conv bias folded into the ones-lane row; pad to (KP, EP).
    w_taps = jnp.transpose(conv_w, (2, 3, 1, 0)).reshape(K, E)
    w_packed = jnp.zeros((KP, EP), jnp.float32)
    w_packed = w_packed.at[:K, :E].set(w_taps)
    w_packed = w_packed.at[K, :E].set(conv_b)

    # Folded BatchNorm affine (eval mode), padded to EP lanes.
    scale = gamma / jnp.sqrt(var + eps)
    shift = beta - mean * scale
    sc_p = jnp.zeros((1, EP), jnp.float32).at[0, :E].set(scale)
    sh_p = jnp.zeros((1, EP), jnp.float32).at[0, :E].set(shift)

    # Classifier 1x1 conv as a dense (EP, NP) matmul + bias.
    cls_w2d = jnp.transpose(cls_w[:, :, 0, 0])                      # (E, NC)
    cw_p = jnp.zeros((EP, NP), jnp.float32).at[:E, :NC].set(cls_w2d)
    cb_p = jnp.zeros((1, NP), jnp.float32).at[0, :NC].set(cls_b)

    out_p, emb_p = pl.pallas_call(
        _tadn_kernel,
        out_shape=(jax.ShapeDtypeStruct((BP, NP), jnp.float32),
                   jax.ShapeDtypeStruct((BP, EP), jnp.float32)),
        grid_spec=pltpu.PrefetchScalarGridSpec(
            num_scalar_prefetch=0,
            grid=(BP // TB,),
            in_specs=[
                pl.BlockSpec((TB, HW, KP), lambda b: (b, 0, 0)),
                pl.BlockSpec((KP, EP), lambda b: (0, 0)),
                pl.BlockSpec((1, EP), lambda b: (0, 0)),
                pl.BlockSpec((1, EP), lambda b: (0, 0)),
                pl.BlockSpec((EP, NP), lambda b: (0, 0)),
                pl.BlockSpec((1, NP), lambda b: (0, 0)),
            ],
            out_specs=[
                pl.BlockSpec((TB, NP), lambda b: (b, 0)),
                pl.BlockSpec((TB, EP), lambda b: (b, 0)),
            ],
        ),
        compiler_params=pltpu.CompilerParams(
            dimension_semantics=("parallel",)),
    )(x_packed, w_packed, sc_p, sh_p, cw_p, cb_p)

    return out_p[:B, :NC], emb_p[:B, :E]


if __name__ == "__main__":
    key = jax.random.PRNGKey(0)
    B, C, H, W = 2, 4, 16, 16          # batch, in_planes, spatial
    E, NC = 32, 10                     # embed_planes, num_classes
    ks = jax.random.split(key, 9)

    x = jax.random.normal(ks[0], (B, C, H, W), jnp.float32)
    conv_w = 0.1 * jax.random.normal(ks[1], (E, C, 3, 3), jnp.float32)
    conv_b = 0.1 * jax.random.normal(ks[2], (E,), jnp.float32)
    gamma = 1.0 + 0.1 * jax.random.normal(ks[3], (E,), jnp.float32)
    beta = 0.1 * jax.random.normal(ks[4], (E,), jnp.float32)
    mean = 0.1 * jax.random.normal(ks[5], (E,), jnp.float32)
    var = jnp.abs(jax.random.normal(ks[6], (E,), jnp.float32)) + 0.5
    cls_w = 0.1 * jax.random.normal(ks[7], (NC, E, 1, 1), jnp.float32)
    cls_b = 0.1 * jax.random.normal(ks[8], (NC,), jnp.float32)
    params = (conv_w, conv_b, gamma, beta, mean, var, cls_w, cls_b)

    out, emb = tadn_classifier_forward(x, params)
    out, emb = jax.block_until_ready((out, emb))

    # Pure-JAX reference (NCHW, matching PyTorch eval semantics).
    eps = 1e-5
    y = jax.lax.conv_general_dilated(
        x, conv_w, window_strides=(1, 1), padding=((1, 1), (1, 1)),
        dimension_numbers=('NCHW', 'OIHW', 'NCHW'))
    y = y + conv_b[None, :, None, None]
    y = jnp.maximum(y, 0.0)
    y = ((y - mean[None, :, None, None])
         * (gamma / jnp.sqrt(var + eps))[None, :, None, None]
         + beta[None, :, None, None])
    emb_ref = y.mean(axis=(2, 3))                    # (B, E)
    out_ref = emb_ref @ cls_w[:, :, 0, 0].T + cls_b  # (B, NC)

    assert jnp.allclose(emb, emb_ref, atol=2e-3, rtol=2e-3), "embed mismatch"
    assert jnp.allclose(out, out_ref, atol=2e-3, rtol=2e-3), "logits mismatch"
    print("KERNEL_OK")
</pallas_src>

<mosaic_0001>
module attributes {stable_mosaic.version = 11 : i64} {
  func.func @_tadn_kernel(%arg0: i32, %arg1: memref<2x256x128xf32, #tpu.memory_space<vmem>>, %arg2: memref<128x128xf32, #tpu.memory_space<vmem>>, %arg3: memref<1x128xf32, #tpu.memory_space<vmem>>, %arg4: memref<1x128xf32, #tpu.memory_space<vmem>>, %arg5: memref<128x128xf32, #tpu.memory_space<vmem>>, %arg6: memref<1x128xf32, #tpu.memory_space<vmem>>, %arg7: memref<2x128xf32, #tpu.memory_space<vmem>>, %arg8: memref<2x128xf32, #tpu.memory_space<vmem>>) attributes {dimension_semantics = [#tpu.dimension_semantics<parallel>], iteration_bounds = array<i64: 1>, scalar_prefetch = 0 : i64, scratch_operands = 0 : i64, tpu.core_type = #tpu.core_type<tc>, window_params = [{transform_indices = @transform_0, window_bounds = array<i64: 2, 256, 128>}, {pipeline_mode = #tpu.pipeline_mode<synchronous>, transform_indices = @transform_1, window_bounds = array<i64: 128, 128>}, {pipeline_mode = #tpu.pipeline_mode<synchronous>, transform_indices = @transform_2, window_bounds = array<i64: 1, 128>}, {pipeline_mode = #tpu.pipeline_mode<synchronous>, transform_indices = @transform_3, window_bounds = array<i64: 1, 128>}, {pipeline_mode = #tpu.pipeline_mode<synchronous>, transform_indices = @transform_4, window_bounds = array<i64: 128, 128>}, {pipeline_mode = #tpu.pipeline_mode<synchronous>, transform_indices = @transform_5, window_bounds = array<i64: 1, 128>}, {transform_indices = @transform_6, window_bounds = array<i64: 2, 128>}, {transform_indices = @transform_7, window_bounds = array<i64: 2, 128>}]} {
    %c0 = arith.constant 0 : index
    %c0_0 = arith.constant 0 : index
    %c0_1 = arith.constant 0 : index
    %0 = vector.load %arg1[%c0, %c0_0, %c0_1] : memref<2x256x128xf32, #tpu.memory_space<vmem>>, vector<2x256x128xf32>
    %1 = vector.shape_cast %0 : vector<2x256x128xf32> to vector<512x128xf32>
    %c0_2 = arith.constant 0 : index
    %c0_3 = arith.constant 0 : index
    %2 = vector.load %arg2[%c0_2, %c0_3] : memref<128x128xf32, #tpu.memory_space<vmem>>, vector<128x128xf32>
    %cst = arith.constant dense<0.000000e+00> : vector<512x128xf32>
    %3 = tpu.matmul %1, %2, %cst {dimension_numbers = #tpu.dot_dimension_numbers<[1], [0], [0], [1], [0, 0, 1, 1], [], []>} : vector<512x128xf32>, vector<128x128xf32>, vector<512x128xf32> -> vector<512x128xf32>
    %cst_4 = arith.constant 0.000000e+00 : f32
    %4 = vector.broadcast %cst_4 : f32 to vector<512x128xf32>
    %5 = arith.maximumf %3, %4 : vector<512x128xf32>
    %6 = vector.shape_cast %5 : vector<512x128xf32> to vector<2x256x128xf32>
    %cst_5 = arith.constant dense<0.000000e+00> : vector<2x128xf32>
    %7 = vector.multi_reduction <add>, %6, %cst_5 [1] : vector<2x256x128xf32> to vector<2x128xf32>
    %cst_6 = arith.constant 3.906250e-03 : f32
    %8 = vector.broadcast %cst_6 : f32 to vector<2x128xf32>
    %9 = arith.mulf %7, %8 : vector<2x128xf32>
    %c0_7 = arith.constant 0 : index
    %c0_8 = arith.constant 0 : index
    %10 = vector.load %arg3[%c0_7, %c0_8] : memref<1x128xf32, #tpu.memory_space<vmem>>, vector<1x128xf32>
    %11 = vector.broadcast %10 : vector<1x128xf32> to vector<2x128xf32>
    %12 = arith.mulf %9, %11 : vector<2x128xf32>
    %c0_9 = arith.constant 0 : index
    %c0_10 = arith.constant 0 : index
    %13 = vector.load %arg4[%c0_9, %c0_10] : memref<1x128xf32, #tpu.memory_space<vmem>>, vector<1x128xf32>
    %14 = vector.broadcast %13 : vector<1x128xf32> to vector<2x128xf32>
    %15 = arith.addf %12, %14 : vector<2x128xf32>
    %c0_11 = arith.constant 0 : index
    %c0_12 = arith.constant 0 : index
    %16 = vector.load %arg8[%c0_11, %c0_12] : memref<2x128xf32, #tpu.memory_space<vmem>>, vector<2x128xf32>
    tpu.vector_store %arg8[%c0_11, %c0_12], %15 {strides = array<i32>} : memref<2x128xf32, #tpu.memory_space<vmem>>, vector<2x128xf32>,
    %c0_13 = arith.constant 0 : index
    %c0_14 = arith.constant 0 : index
    %17 = vector.load %arg5[%c0_13, %c0_14] : memref<128x128xf32, #tpu.memory_space<vmem>>, vector<128x128xf32>
    %cst_15 = arith.constant dense<0.000000e+00> : vector<2x128xf32>
    %18 = tpu.matmul %15, %17, %cst_15 {dimension_numbers = #tpu.dot_dimension_numbers<[1], [0], [0], [1], [0, 0, 1, 1], [], []>} : vector<2x128xf32>, vector<128x128xf32>, vector<2x128xf32> -> vector<2x128xf32>
    %c0_16 = arith.constant 0 : index
    %c0_17 = arith.constant 0 : index
    %19 = vector.load %arg6[%c0_16, %c0_17] : memref<1x128xf32, #tpu.memory_space<vmem>>, vector<1x128xf32>
    %20 = vector.broadcast %19 : vector<1x128xf32> to vector<2x128xf32>
    %21 = arith.addf %18, %20 : vector<2x128xf32>
    %c0_18 = arith.constant 0 : index
    %c0_19 = arith.constant 0 : index
    %22 = vector.load %arg7[%c0_18, %c0_19] : memref<2x128xf32, #tpu.memory_space<vmem>>, vector<2x128xf32>
    tpu.vector_store %arg7[%c0_18, %c0_19], %21 {strides = array<i32>} : memref<2x128xf32, #tpu.memory_space<vmem>>, vector<2x128xf32>,
    return
  }
  func.func @transform_0(%arg0: i32) -> (i32, i32, i32) {
    %c0_i32 = arith.constant 0 : i32
    %c0_i32_0 = arith.constant 0 : i32
    %c0_i32_1 = arith.constant 0 : i32
    return %arg0, %c0_i32, %c0_i32_0 : i32, i32, i32
  }
  func.func @transform_1(%arg0: i32) -> (i32, i32) {
    %c0_i32 = arith.constant 0 : i32
    %c0_i32_0 = arith.constant 0 : i32
    %c0_i32_1 = arith.constant 0 : i32
    return %c0_i32, %c0_i32_0 : i32, i32
  }
  func.func @transform_2(%arg0: i32) -> (i32, i32) {
    %c0_i32 = arith.constant 0 : i32
    %c0_i32_0 = arith.constant 0 : i32
    %c0_i32_1 = arith.constant 0 : i32
    return %c0_i32, %c0_i32_0 : i32, i32
  }
  func.func @transform_3(%arg0: i32) -> (i32, i32) {
    %c0_i32 = arith.constant 0 : i32
    %c0_i32_0 = arith.constant 0 : i32
    %c0_i32_1 = arith.constant 0 : i32
    return %c0_i32, %c0_i32_0 : i32, i32
  }
  func.func @transform_4(%arg0: i32) -> (i32, i32) {
    %c0_i32 = arith.constant 0 : i32
    %c0_i32_0 = arith.constant 0 : i32
    %c0_i32_1 = arith.constant 0 : i32
    return %c0_i32, %c0_i32_0 : i32, i32
  }
  func.func @transform_5(%arg0: i32) -> (i32, i32) {
    %c0_i32 = arith.constant 0 : i32
    %c0_i32_0 = arith.constant 0 : i32
    %c0_i32_1 = arith.constant 0 : i32
    return %c0_i32, %c0_i32_0 : i32, i32
  }
  func.func @transform_6(%arg0: i32) -> (i32, i32) {
    %c0_i32 = arith.constant 0 : i32
    %c0_i32_0 = arith.constant 0 : i32
    return %arg0, %c0_i32 : i32, i32
  }
  func.func @transform_7(%arg0: i32) -> (i32, i32) {
    %c0_i32 = arith.constant 0 : i32
    %c0_i32_0 = arith.constant 0 : i32
    return %arg0, %c0_i32 : i32, i32
  }
}

</mosaic_0001>

<llo_original>
// kernel: tpu_custom_call.1
$region0: #{tpu_custom_call.1}
  #allocation0 [shape = 'u32[]', space=smem, size = 0x4, offset = 0x4, fixed_abs, tag = 'smem constant byte address 0x4 - core index']
  #allocation1 [shape = 'u32[144,128]{1,0:T(1,128)}', space=vmem, size = 0x12000, scoped, tag = 'internal scratch']
  %s0 = inlined_call_operand.hbm [shape: f32[2,256,128], index: 0, kind: input, shape index: {}]
  %s1 = inlined_call_operand.hbm [shape: f32[128,128], index: 1, kind: input, shape index: {}]
  %s2 = inlined_call_operand.vmem [shape: f32[1,128], index: 2, kind: input, shape index: {}]
  %s3 = inlined_call_operand.vmem [shape: f32[1,128], index: 3, kind: input, shape index: {}]
  %s4 = inlined_call_operand.hbm [shape: f32[128,128], index: 4, kind: input, shape index: {}]
  %s5 = inlined_call_operand.vmem [shape: f32[1,128], index: 5, kind: input, shape index: {}]
  %s6 = inlined_call_operand.hbm [shape: f32[2,128], index: 6, kind: output, shape index: {0}]
  %s7 = inlined_call_operand.hbm [shape: f32[2,128], index: 7, kind: output, shape index: {1}]
  %8 = xla_tuple %s6, %s7
  %s9 = sld [smem:[#allocation0]]
  $region54: #{tpu_custom_call.1} parent=0
    _
  %s11 = ssub.s32 1, %s9
  %s12 = scalar_select 0, %s11, %s9
  $region1: #{tpu_custom_call.1} parent=0
    #allocation2 [shape = 'u8[262144]{0}', space=vmem, size = 0x40000, scoped, tag = 'input window, operand 0, single buffered']
    #allocation3 [shape = 's32[1]{0}', space=sflag, size = 0x4, scoped, tag = 'scoped memory for tpu_custom_call.1']
    #allocation4 [shape = 's32[1]{0}', space=sflag, size = 0x4, scoped, tag = 'scoped memory for tpu_custom_call.1']
    #allocation5 [shape = 'u8[65536]{0}', space=vmem, size = 0x10000, scoped, tag = 'input window, operand 1, single buffered']
    #allocation6 [shape = 's32[1]{0}', space=sflag, size = 0x4, scoped, tag = 'scoped memory for tpu_custom_call.1']
    #allocation7 [shape = 'u8[65536]{0}', space=vmem, size = 0x10000, scoped, tag = 'input window, operand 4, single buffered']
    #allocation8 [shape = 'u8[1024]{0}', space=vmem, size = 0x400, scoped, tag = 'output window, operand 0, single buffered']
    #allocation9 [shape = 'u8[1024]{0}', space=vmem, size = 0x400, scoped, tag = 'output window, operand 1, single buffered']
    #allocation10 [shape = 's32[1]{0}', space=sflag, size = 0x4, scoped, tag = 'scoped memory for tpu_custom_call.1']
    %13 = vsyncpa [#allocation3], 0
    %14 = vsyncpa [#allocation6], 0
    %15 = vsyncpa [#allocation4], 0
    %16 = vsyncpa [#allocation10], 0
    // Predicated region
    $region2: #{tpu_custom_call.1} parent=1 // pred_check
      _
    $region3: #{tpu_custom_call.1} parent=1 // pred_check_branch
      %18 = sbr.rel (0) target = $region5
    $region4: #{tpu_custom_call.1} parent=1 // pred_region
      %s20 = ssub.s32 8192, 8192
      %21 = vsyncadd [#allocation3], %s20
      %s22 = sshll.u32 [#allocation2], 4
      %s23 = int_to_ptr.vmem [resolvable:$true] %s22
      %28 = dma.hbm_to_vmem [thread:$0]  %s0, 8192, %s23, [#allocation3], 128, 128, 8
    $region5: #{tpu_custom_call.1} parent=1 // pred_fallthru
      _
    // Predicated region
    $region6: #{tpu_custom_call.1} parent=1 // pred_check
      _
    $region7: #{tpu_custom_call.1} parent=1 // pred_check_branch
      %30 = sbr.rel (0) target = $region9
    $region8: #{tpu_custom_call.1} parent=1 // pred_region
      %s32 = ssub.s32 2048, 2048
      %33 = vsyncadd [#allocation6], %s32
      %s34 = sshll.u32 [#allocation5], 4
      %s35 = int_to_ptr.vmem [resolvable:$true] %s34
      %40 = dma.hbm_to_vmem [thread:$0]  %s1, 2048, %s35, [#allocation6], 128, 128, 8
    $region9: #{tpu_custom_call.1} parent=1 // pred_fallthru
      _
    // Predicated region
    $region10: #{tpu_custom_call.1} parent=1 // pred_check
      _
    $region11: #{tpu_custom_call.1} parent=1 // pred_check_branch
      %42 = sbr.rel (0) target = $region13
    $region12: #{tpu_custom_call.1} parent=1 // pred_region
      _
    $region13: #{tpu_custom_call.1} parent=1 // pred_fallthru
      _
    // Predicated region
    $region14: #{tpu_custom_call.1} parent=1 // pred_check
      _
    $region15: #{tpu_custom_call.1} parent=1 // pred_check_branch
      %44 = sbr.rel (0) target = $region17
    $region16: #{tpu_custom_call.1} parent=1 // pred_region
      _
    $region17: #{tpu_custom_call.1} parent=1 // pred_fallthru
      _
    // Predicated region
    $region18: #{tpu_custom_call.1} parent=1 // pred_check
      _
    $region19: #{tpu_custom_call.1} parent=1 // pred_check_branch
      %46 = sbr.rel (0) target = $region21
    $region20: #{tpu_custom_call.1} parent=1 // pred_region
      %s48 = ssub.s32 2048, 2048
      %49 = vsyncadd [#allocation6], %s48
      %s50 = sshll.u32 [#allocation7], 4
      %s51 = int_to_ptr.vmem [resolvable:$true] %s50
      %56 = dma.hbm_to_vmem [thread:$0]  %s4, 2048, %s51, [#allocation6], 128, 128, 8
    $region21: #{tpu_custom_call.1} parent=1 // pred_fallthru
      _
    // Predicated region
    $region22: #{tpu_custom_call.1} parent=1 // pred_check
      _
    $region23: #{tpu_custom_call.1} parent=1 // pred_check_branch
      %58 = sbr.rel (0) target = $region25
    $region24: #{tpu_custom_call.1} parent=1 // pred_region
      _
    $region25: #{tpu_custom_call.1} parent=1 // pred_fallthru
      _
    // Predicated region
    $region26: #{tpu_custom_call.1} parent=1 // pred_check
      _
    $region27: #{tpu_custom_call.1} parent=1 // pred_check_branch
      %60 = sbr.rel (0) target = $region29
    $region28: #{tpu_custom_call.1} parent=1 // pred_region
      %61 = dma.done [#allocation3], 8192
    $region29: #{tpu_custom_call.1} parent=1 // pred_fallthru
      _
    // Predicated region
    $region30: #{tpu_custom_call.1} parent=1 // pred_check
      _
    $region31: #{tpu_custom_call.1} parent=1 // pred_check_branch
      %63 = sbr.rel (0) target = $region33
    $region32: #{tpu_custom_call.1} parent=1 // pred_region
      %64 = dma.done [#allocation6], 2048
    $region33: #{tpu_custom_call.1} parent=1 // pred_fallthru
      _
    // Predicated region
    $region34: #{tpu_custom_call.1} parent=1 // pred_check
      _
    $region35: #{tpu_custom_call.1} parent=1 // pred_check_branch
      %66 = sbr.rel (0) target = $region37
    $region36: #{tpu_custom_call.1} parent=1 // pred_region
      %67 = dma.done [#allocation6], 2048
    $region37: #{tpu_custom_call.1} parent=1 // pred_fallthru
      _
    %v68 = vld [vmem:[#allocation2] sm:$0xff]
    %v69 = vld [vmem:[#allocation2 + $0x8] sm:$0xff]
    %v70 = vld [vmem:[#allocation2 + $0x10] sm:$0xff]
    %v71 = vld [vmem:[#allocation2 + $0x18] sm:$0xff]
    %v72 = vld [vmem:[#allocation2 + $0x20] sm:$0xff]
    %v73 = vld [vmem:[#allocation2 + $0x28] sm:$0xff]
    %v74 = vld [vmem:[#allocation2 + $0x30] sm:$0xff]
    %v75 = vld [vmem:[#allocation2 + $0x38] sm:$0xff]
    %v76 = vld [vmem:[#allocation2 + $0x40] sm:$0xff]
    %v77 = vld [vmem:[#allocation2 + $0x48] sm:$0xff]
    %v78 = vld [vmem:[#allocation2 + $0x50] sm:$0xff]
    %v79 = vld [vmem:[#allocation2 + $0x58] sm:$0xff]
    %v80 = vld [vmem:[#allocation2 + $0x60] sm:$0xff]
    %v81 = vld [vmem:[#allocation2 + $0x68] sm:$0xff]
    %v82 = vld [vmem:[#allocation2 + $0x70] sm:$0xff]
    %v83 = vld [vmem:[#allocation2 + $0x78] sm:$0xff]
    %v84 = vld [vmem:[#allocation2 + $0x80] sm:$0xff]
    %v85 = vld [vmem:[#allocation2 + $0x88] sm:$0xff]
    %v86 = vld [vmem:[#allocation2 + $0x90] sm:$0xff]
    %v87 = vld [vmem:[#allocation2 + $0x98] sm:$0xff]
    %v88 = vld [vmem:[#allocation2 + $0xa0] sm:$0xff]
    %v89 = vld [vmem:[#allocation2 + $0xa8] sm:$0xff]
    %v90 = vld [vmem:[#allocation2 + $0xb0] sm:$0xff]
    %v91 = vld [vmem:[#allocation2 + $0xb8] sm:$0xff]
    %v92 = vld [vmem:[#allocation2 + $0xc0] sm:$0xff]
    %v93 = vld [vmem:[#allocation2 + $0xc8] sm:$0xff]
    %v94 = vld [vmem:[#allocation2 + $0xd0] sm:$0xff]
    %v95 = vld [vmem:[#allocation2 + $0xd8] sm:$0xff]
    %v96 = vld [vmem:[#allocation2 + $0xe0] sm:$0xff]
    %v97 = vld [vmem:[#allocation2 + $0xe8] sm:$0xff]
    %v98 = vld [vmem:[#allocation2 + $0xf0] sm:$0xff]
    %v99 = vld [vmem:[#allocation2 + $0xf8] sm:$0xff]
    %v100 = vld [vmem:[#allocation2 + $0x100] sm:$0xff]
    %v101 = vld [vmem:[#allocation2 + $0x108] sm:$0xff]
    %v102 = vld [vmem:[#allocation2 + $0x110] sm:$0xff]
    %v103 = vld [vmem:[#allocation2 + $0x118] sm:$0xff]
    %v104 = vld [vmem:[#allocation2 + $0x120] sm:$0xff]
    %v105 = vld [vmem:[#allocation2 + $0x128] sm:$0xff]
    %v106 = vld [vmem:[#allocation2 + $0x130] sm:$0xff]
    %v107 = vld [vmem:[#allocation2 + $0x138] sm:$0xff]
    %v108 = vld [vmem:[#allocation2 + $0x140] sm:$0xff]
    %v109 = vld [vmem:[#allocation2 + $0x148] sm:$0xff]
    %v110 = vld [vmem:[#allocation2 + $0x150] sm:$0xff]
    %v111 = vld [vmem:[#allocation2 + $0x158] sm:$0xff]
    %v112 = vld [vmem:[#allocation2 + $0x160] sm:$0xff]
    %v113 = vld [vmem:[#allocation2 + $0x168] sm:$0xff]
    %v114 = vld [vmem:[#allocation2 + $0x170] sm:$0xff]
    %v115 = vld [vmem:[#allocation2 + $0x178] sm:$0xff]
    %v116 = vld [vmem:[#allocation2 + $0x180] sm:$0xff]
    %v117 = vld [vmem:[#allocation2 + $0x188] sm:$0xff]
    %v118 = vld [vmem:[#allocation2 + $0x190] sm:$0xff]
    %v119 = vld [vmem:[#allocation2 + $0x198] sm:$0xff]
    %v120 = vld [vmem:[#allocation2 + $0x1a0] sm:$0xff]
    %v121 = vld [vmem:[#allocation2 + $0x1a8] sm:$0xff]
    %v122 = vld [vmem:[#allocation2 + $0x1b0] sm:$0xff]
    %v123 = vld [vmem:[#allocation2 + $0x1b8] sm:$0xff]
    %v124 = vld [vmem:[#allocation2 + $0x1c0] sm:$0xff]
    %v125 = vld [vmem:[#allocation2 + $0x1c8] sm:$0xff]
    %v126 = vld [vmem:[#allocation2 + $0x1d0] sm:$0xff]
    %v127 = vld [vmem:[#allocation2 + $0x1d8] sm:$0xff]
    %v128 = vld [vmem:[#allocation2 + $0x1e0] sm:$0xff]
    %v129 = vld [vmem:[#allocation2 + $0x1e8] sm:$0xff]
    %v130 = vld [vmem:[#allocation2 + $0x1f0] sm:$0xff]
    %v131 = vld [vmem:[#allocation2 + $0x1f8] sm:$0xff]
    %v132 = vld [vmem:[#allocation5] sm:$0xff]
    %v133 = vld [vmem:[#allocation5 + $0x8] sm:$0xff]
    %v134 = vld [vmem:[#allocation5 + $0x10] sm:$0xff]
    %v135 = vld [vmem:[#allocation5 + $0x18] sm:$0xff]
    %v136 = vld [vmem:[#allocation5 + $0x20] sm:$0xff]
    %v137 = vld [vmem:[#allocation5 + $0x28] sm:$0xff]
    %v138 = vld [vmem:[#allocation5 + $0x30] sm:$0xff]
    %v139 = vld [vmem:[#allocation5 + $0x38] sm:$0xff]
    %v140 = vld [vmem:[#allocation5 + $0x40] sm:$0xff]
    %v141 = vld [vmem:[#allocation5 + $0x48] sm:$0xff]
    %v142 = vld [vmem:[#allocation5 + $0x50] sm:$0xff]
    %v143 = vld [vmem:[#allocation5 + $0x58] sm:$0xff]
    %v144 = vld [vmem:[#allocation5 + $0x60] sm:$0xff]
    %v145 = vld [vmem:[#allocation5 + $0x68] sm:$0xff]
    %v146 = vld [vmem:[#allocation5 + $0x70] sm:$0xff]
    %v147 = vld [vmem:[#allocation5 + $0x78] sm:$0xff]
    %148 = vmatprep.subr.mxu0 0.0
    %149 = vmatpush1.msra.mxu0 %v132
    %150 = vmatprep.subr.mxu0 0.0
    %151 = vmatpush1.msra.mxu0 %v133
    %152 = vmatprep.subr.mxu0 0.0
    %153 = vmatpush1.msra.mxu0 %v134
    %154 = vmatprep.subr.mxu0 0.0
    %155 = vmatpush1.msra.mxu0 %v135
    %156 = vmatprep.subr.mxu0 0.0
    %157 = vmatpush1.msra.mxu0 %v136
    %158 = vmatprep.subr.mxu0 0.0
    %159 = vmatpush1.msra.mxu0 %v137
    %160 = vmatprep.subr.mxu0 0.0
    %161 = vmatpush1.msra.mxu0 %v138
    %162 = vmatprep.subr.mxu0 0.0
    %163 = vmatpush1.msra.mxu0 %v139
    %164 = vmatprep.subr.mxu0 0.0
    %165 = vmatpush1.msra.mxu0 %v140
    %166 = vmatprep.subr.mxu0 0.0
    %167 = vmatpush1.msra.mxu0 %v141
    %168 = vmatprep.subr.mxu0 0.0
    %169 = vmatpush1.msra.mxu0 %v142
    %170 = vmatprep.subr.mxu0 0.0
    %171 = vmatpush1.msra.mxu0 %v143
    %172 = vmatprep.subr.mxu0 0.0
    %173 = vmatpush1.msra.mxu0 %v144
    %174 = vmatprep.subr.mxu0 0.0
    %175 = vmatpush1.msra.mxu0 %v145
    %176 = vmatprep.subr.mxu0 0.0
    %177 = vmatpush1.msra.mxu0 %v146
    %178 = vmatprep.subr.mxu0 0.0
    %179 = vmatpush1.msra.mxu0 %v147
    %180 = vmatprep.subr.mxu0 0.0
    %181 = vmatpush1.msra.mxu0 0.0
    %182 = vmatprep.subr.mxu0 0.0
    %183 = vmatpush1.msra.mxu0 0.0
    %184 = vmatprep.subr.mxu0 0.0
    %185 = vmatpush1.msra.mxu0 0.0
    %186 = vmatprep.subr.mxu0 0.0
    %187 = vmatpush1.msra.mxu0 0.0
    %188 = vmatprep.subr.mxu0 0.0
    %189 = vmatpush1.msra.mxu0 0.0
    %190 = vmatprep.subr.mxu0 0.0
    %191 = vmatpush1.msra.mxu0 0.0
    %192 = vmatprep.subr.mxu0 0.0
    %193 = vmatpush1.msra.mxu0 0.0
    %194 = vmatprep.subr.mxu0 0.0
    %195 = vmatpush1.msra.mxu0 0.0
    %196 = vmatprep.subr.mxu0 0.0
    %197 = vmatpush1.msra.mxu0 0.0
    %198 = vmatprep.subr.mxu0 0.0
    %199 = vmatpush1.msra.mxu0 0.0
    %200 = vmatprep.subr.mxu0 0.0
    %201 = vmatpush1.msra.mxu0 0.0
    %202 = vmatprep.subr.mxu0 0.0
    %203 = vmatpush1.msra.mxu0 0.0
    %204 = vmatprep.subr.mxu0 0.0
    %205 = vmatpush1.msra.mxu0 0.0
    %206 = vmatprep.subr.mxu0 0.0
    %207 = vmatpush1.msra.mxu0 0.0
    %208 = vmatprep.subr.mxu0 0.0
    %209 = vmatpush1.msra.mxu0 0.0
    %210 = vmatprep.subr.mxu0 0.0
    %211 = vmatpush1.msra.mxu0 0.0
    %212 = vmatprep.mubr.f32.mxu0 0.0
    %213 = vmatmul.mubr.f32.gmra.mrb[0].mxu0 %v68
    %v214 = vpop.f32.mrb[0].mxu0
    %v215 = vadd.f32 0.0, %v214
    %v216 = vpop.f32.mrb[0].mxu0
    %217 = vmatprep.mubr.f32.mxu0 0.0
    %218 = vmatmul.mubr.f32.gmra.mrb[0].mxu0 %v69
    %v219 = vpop.f32.mrb[0].mxu0
    %v220 = vadd.f32 0.0, %v219
    %v221 = vpop.f32.mrb[0].mxu0
    %222 = vmatprep.mubr.f32.mxu0 0.0
    %223 = vmatmul.mubr.f32.gmra.mrb[0].mxu0 %v70
    %v224 = vpop.f32.mrb[0].mxu0
    %v225 = vadd.f32 0.0, %v224
    %v226 = vpop.f32.mrb[0].mxu0
    %227 = vmatprep.mubr.f32.mxu0 0.0
    %228 = vmatmul.mubr.f32.gmra.mrb[0].mxu0 %v71
    %v229 = vpop.f32.mrb[0].mxu0
    %v230 = vadd.f32 0.0, %v229
    %v231 = vpop.f32.mrb[0].mxu0
    %232 = vmatprep.mubr.f32.mxu0 0.0
    %233 = vmatmul.mubr.f32.gmra.mrb[0].mxu0 %v72
    %v234 = vpop.f32.mrb[0].mxu0
    %v235 = vadd.f32 0.0, %v234
    %v236 = vpop.f32.mrb[0].mxu0
    %237 = vmatprep.mubr.f32.mxu0 0.0
    %238 = vmatmul.mubr.f32.gmra.mrb[0].mxu0 %v73
    %v239 = vpop.f32.mrb[0].mxu0
    %v240 = vadd.f32 0.0, %v239
    %v241 = vpop.f32.mrb[0].mxu0
    %242 = vmatprep.mubr.f32.mxu0 0.0
    %243 = vmatmul.mubr.f32.gmra.mrb[0].mxu0 %v74
    %v244 = vpop.f32.mrb[0].mxu0
    %v245 = vadd.f32 0.0, %v244
    %v246 = vpop.f32.mrb[0].mxu0
    %247 = vmatprep.mubr.f32.mxu0 0.0
    %248 = vmatmul.mubr.f32.gmra.mrb[0].mxu0 %v75
    %v249 = vpop.f32.mrb[0].mxu0
    %v250 = vadd.f32 0.0, %v249
    %v251 = vpop.f32.mrb[0].mxu0
    %252 = vmatprep.mubr.f32.mxu0 0.0
    %253 = vmatmul.mubr.f32.gmra.mrb[0].mxu0 %v76
    %v254 = vpop.f32.mrb[0].mxu0
    %v255 = vadd.f32 0.0, %v254
    %v256 = vpop.f32.mrb[0].mxu0
    %257 = vmatprep.mubr.f32.mxu0 0.0
    %258 = vmatmul.mubr.f32.gmra.mrb[0].mxu0 %v77
    %v259 = vpop.f32.mrb[0].mxu0
    %v260 = vadd.f32 0.0, %v259
    %v261 = vpop.f32.mrb[0].mxu0
    %262 = vmatprep.mubr.f32.mxu0 0.0
    %263 = vmatmul.mubr.f32.gmra.mrb[0].mxu0 %v78
    %v264 = vpop.f32.mrb[0].mxu0
    %v265 = vadd.f32 0.0, %v264
    %v266 = vpop.f32.mrb[0].mxu0
    %267 = vmatprep.mubr.f32.mxu0 0.0
    %268 = vmatmul.mubr.f32.gmra.mrb[0].mxu0 %v79
    %v269 = vpop.f32.mrb[0].mxu0
    %v270 = vadd.f32 0.0, %v269
    %v271 = vpop.f32.mrb[0].mxu0
    %272 = vmatprep.mubr.f32.mxu0 0.0
    %273 = vmatmul.mubr.f32.gmra.mrb[0].mxu0 %v80
    %v274 = vpop.f32.mrb[0].mxu0
    %v275 = vadd.f32 0.0, %v274
    %v276 = vpop.f32.mrb[0].mxu0
    %277 = vmatprep.mubr.f32.mxu0 0.0
    %278 = vmatmul.mubr.f32.gmra.mrb[0].mxu0 %v81
    %v279 = vpop.f32.mrb[0].mxu0
    %v280 = vadd.f32 0.0, %v279
    %v281 = vpop.f32.mrb[0].mxu0
    %282 = vmatprep.mubr.f32.mxu0 0.0
    %283 = vmatmul.mubr.f32.gmra.mrb[0].mxu0 %v82
    %v284 = vpop.f32.mrb[0].mxu0
    %v285 = vadd.f32 0.0, %v284
    %v286 = vpop.f32.mrb[0].mxu0
    %287 = vmatprep.mubr.f32.mxu0 0.0
    %288 = vmatmul.mubr.f32.gmra.mrb[0].mxu0 %v83
    %v289 = vpop.f32.mrb[0].mxu0
    %v290 = vadd.f32 0.0, %v289
    %v291 = vpop.f32.mrb[0].mxu0
    %292 = vmatprep.mubr.f32.mxu0 0.0
    %293 = vmatmul.mubr.f32.gmra.mrb[0].mxu0 %v84
    %v294 = vpop.f32.mrb[0].mxu0
    %v295 = vadd.f32 0.0, %v294
    %v296 = vpop.f32.mrb[0].mxu0
    %297 = vmatprep.mubr.f32.mxu0 0.0
    %298 = vmatmul.mubr.f32.gmra.mrb[0].mxu0 %v85
    %v299 = vpop.f32.mrb[0].mxu0
    %v300 = vadd.f32 0.0, %v299
    %v301 = vpop.f32.mrb[0].mxu0
    %302 = vmatprep.mubr.f32.mxu0 0.0
    %303 = vmatmul.mubr.f32.gmra.mrb[0].mxu0 %v86
    %v304 = vpop.f32.mrb[0].mxu0
    %v305 = vadd.f32 0.0, %v304
    %v306 = vpop.f32.mrb[0].mxu0
    %307 = vmatprep.mubr.f32.mxu0 0.0
    %308 = vmatmul.mubr.f32.gmra.mrb[0].mxu0 %v87
    %v309 = vpop.f32.mrb[0].mxu0
    %v310 = vadd.f32 0.0, %v309
    %v311 = vpop.f32.mrb[0].mxu0
    %312 = vmatprep.mubr.f32.mxu0 0.0
    %313 = vmatmul.mubr.f32.gmra.mrb[0].mxu0 %v88
    %v314 = vpop.f32.mrb[0].mxu0
    %v315 = vadd.f32 0.0, %v314
    %v316 = vpop.f32.mrb[0].mxu0
    %317 = vmatprep.mubr.f32.mxu0 0.0
    %318 = vmatmul.mubr.f32.gmra.mrb[0].mxu0 %v89
    %v319 = vpop.f32.mrb[0].mxu0
    %v320 = vadd.f32 0.0, %v319
    %v321 = vpop.f32.mrb[0].mxu0
    %322 = vmatprep.mubr.f32.mxu0 0.0
    %323 = vmatmul.mubr.f32.gmra.mrb[0].mxu0 %v90
    %v324 = vpop.f32.mrb[0].mxu0
    %v325 = vadd.f32 0.0, %v324
    %v326 = vpop.f32.mrb[0].mxu0
    %327 = vmatprep.mubr.f32.mxu0 0.0
    %328 = vmatmul.mubr.f32.gmra.mrb[0].mxu0 %v91
    %v329 = vpop.f32.mrb[0].mxu0
    %v330 = vadd.f32 0.0, %v329
    %v331 = vpop.f32.mrb[0].mxu0
    %332 = vmatprep.mubr.f32.mxu0 0.0
    %333 = vmatmul.mubr.f32.gmra.mrb[0].mxu0 %v92
    %v334 = vpop.f32.mrb[0].mxu0
    %v335 = vadd.f32 0.0, %v334
    %v336 = vpop.f32.mrb[0].mxu0
    %337 = vmatprep.mubr.f32.mxu0 0.0
    %338 = vmatmul.mubr.f32.gmra.mrb[0].mxu0 %v93
    %v339 = vpop.f32.mrb[0].mxu0
    %v340 = vadd.f32 0.0, %v339
    %v341 = vpop.f32.mrb[0].mxu0
    %342 = vmatprep.mubr.f32.mxu0 0.0
    %343 = vmatmul.mubr.f32.gmra.mrb[0].mxu0 %v94
    %v344 = vpop.f32.mrb[0].mxu0
    %v345 = vadd.f32 0.0, %v344
    %v346 = vpop.f32.mrb[0].mxu0
    %347 = vmatprep.mubr.f32.mxu0 0.0
    %348 = vmatmul.mubr.f32.gmra.mrb[0].mxu0 %v95
    %v349 = vpop.f32.mrb[0].mxu0
    %v350 = vadd.f32 0.0, %v349
    %v351 = vpop.f32.mrb[0].mxu0
    %352 = vmatprep.mubr.f32.mxu0 0.0
    %353 = vmatmul.mubr.f32.gmra.mrb[0].mxu0 %v96
    %v354 = vpop.f32.mrb[0].mxu0
    %v355 = vadd.f32 0.0, %v354
    %v356 = vpop.f32.mrb[0].mxu0
    %357 = vmatprep.mubr.f32.mxu0 0.0
    %358 = vmatmul.mubr.f32.gmra.mrb[0].mxu0 %v97
    %v359 = vpop.f32.mrb[0].mxu0
    %v360 = vadd.f32 0.0, %v359
    %v361 = vpop.f32.mrb[0].mxu0
    %362 = vmatprep.mubr.f32.mxu0 0.0
    %363 = vmatmul.mubr.f32.gmra.mrb[0].mxu0 %v98
    %v364 = vpop.f32.mrb[0].mxu0
    %v365 = vadd.f32 0.0, %v364
    %v366 = vpop.f32.mrb[0].mxu0
    %367 = vmatprep.mubr.f32.mxu0 0.0
    %368 = vmatmul.mubr.f32.gmra.mrb[0].mxu0 %v99
    %v369 = vpop.f32.mrb[0].mxu0
    %v370 = vadd.f32 0.0, %v369
    %v371 = vpop.f32.mrb[0].mxu0
    %372 = vmatprep.mubr.f32.mxu0 0.0
    %373 = vmatmul.mubr.f32.gmra.mrb[0].mxu0 %v100
    %v374 = vpop.f32.mrb[0].mxu0
    %v375 = vadd.f32 0.0, %v374
    %v376 = vpop.f32.mrb[0].mxu0
    %377 = vmatprep.mubr.f32.mxu0 0.0
    %378 = vmatmul.mubr.f32.gmra.mrb[0].mxu0 %v101
    %v379 = vpop.f32.mrb[0].mxu0
    %v380 = vadd.f32 0.0, %v379
    %v381 = vpop.f32.mrb[0].mxu0
    %382 = vmatprep.mubr.f32.mxu0 0.0
    %383 = vmatmul.mubr.f32.gmra.mrb[0].mxu0 %v102
    %v384 = vpop.f32.mrb[0].mxu0
    %v385 = vadd.f32 0.0, %v384
    %v386 = vpop.f32.mrb[0].mxu0
    %387 = vmatprep.mubr.f32.mxu0 0.0
    %388 = vmatmul.mubr.f32.gmra.mrb[0].mxu0 %v103
    %v389 = vpop.f32.mrb[0].mxu0
    %v390 = vadd.f32 0.0, %v389
    %v391 = vpop.f32.mrb[0].mxu0
    %392 = vmatprep.mubr.f32.mxu0 0.0
    %393 = vmatmul.mubr.f32.gmra.mrb[0].mxu0 %v104
    %v394 = vpop.f32.mrb[0].mxu0
    %v395 = vadd.f32 0.0, %v394
    %v396 = vpop.f32.mrb[0].mxu0
    %397 = vmatprep.mubr.f32.mxu0 0.0
    %398 = vmatmul.mubr.f32.gmra.mrb[0].mxu0 %v105
    %v399 = vpop.f32.mrb[0].mxu0
    %v400 = vadd.f32 0.0, %v399
    %v401 = vpop.f32.mrb[0].mxu0
    %402 = vmatprep.mubr.f32.mxu0 0.0
    %403 = vmatmul.mubr.f32.gmra.mrb[0].mxu0 %v106
    %v404 = vpop.f32.mrb[0].mxu0
    %v405 = vadd.f32 0.0, %v404
    %v406 = vpop.f32.mrb[0].mxu0
    %407 = vmatprep.mubr.f32.mxu0 0.0
    %408 = vmatmul.mubr.f32.gmra.mrb[0].mxu0 %v107
    %v409 = vpop.f32.mrb[0].mxu0
    %v410 = vadd.f32 0.0, %v409
    %v411 = vpop.f32.mrb[0].mxu0
    %412 = vmatprep.mubr.f32.mxu0 0.0
    %413 = vmatmul.mubr.f32.gmra.mrb[0].mxu0 %v108
    %v414 = vpop.f32.mrb[0].mxu0
    %v415 = vadd.f32 0.0, %v414
    %v416 = vpop.f32.mrb[0].mxu0
    %417 = vmatprep.mubr.f32.mxu0 0.0
    %418 = vmatmul.mubr.f32.gmra.mrb[0].mxu0 %v109
    %v419 = vpop.f32.mrb[0].mxu0
    %v420 = vadd.f32 0.0, %v419
    %v421 = vpop.f32.mrb[0].mxu0
    %422 = vmatprep.mubr.f32.mxu0 0.0
    %423 = vmatmul.mubr.f32.gmra.mrb[0].mxu0 %v110
    %v424 = vpop.f32.mrb[0].mxu0
    %v425 = vadd.f32 0.0, %v424
    %v426 = vpop.f32.mrb[0].mxu0
    %427 = vmatprep.mubr.f32.mxu0 0.0
    %428 = vmatmul.mubr.f32.gmra.mrb[0].mxu0 %v111
    %v429 = vpop.f32.mrb[0].mxu0
    %v430 = vadd.f32 0.0, %v429
    %v431 = vpop.f32.mrb[0].mxu0
    %432 = vmatprep.mubr.f32.mxu0 0.0
    %433 = vmatmul.mubr.f32.gmra.mrb[0].mxu0 %v112
    %v434 = vpop.f32.mrb[0].mxu0
    %v435 = vadd.f32 0.0, %v434
    %v436 = vpop.f32.mrb[0].mxu0
    %437 = vmatprep.mubr.f32.mxu0 0.0
    %438 = vmatmul.mubr.f32.gmra.mrb[0].mxu0 %v113
    %v439 = vpop.f32.mrb[0].mxu0
    %v440 = vadd.f32 0.0, %v439
    %v441 = vpop.f32.mrb[0].mxu0
    %442 = vmatprep.mubr.f32.mxu0 0.0
    %443 = vmatmul.mubr.f32.gmra.mrb[0].mxu0 %v114
    %v444 = vpop.f32.mrb[0].mxu0
    %v445 = vadd.f32 0.0, %v444
    %v446 = vpop.f32.mrb[0].mxu0
    %447 = vmatprep.mubr.f32.mxu0 0.0
    %448 = vmatmul.mubr.f32.gmra.mrb[0].mxu0 %v115
    %v449 = vpop.f32.mrb[0].mxu0
    %v450 = vadd.f32 0.0, %v449
    %v451 = vpop.f32.mrb[0].mxu0
    %452 = vmatprep.mubr.f32.mxu0 0.0
    %453 = vmatmul.mubr.f32.gmra.mrb[0].mxu0 %v116
    %v454 = vpop.f32.mrb[0].mxu0
    %v455 = vadd.f32 0.0, %v454
    %v456 = vpop.f32.mrb[0].mxu0
    %457 = vmatprep.mubr.f32.mxu0 0.0
    %458 = vmatmul.mubr.f32.gmra.mrb[0].mxu0 %v117
    %v459 = vpop.f32.mrb[0].mxu0
    %v460 = vadd.f32 0.0, %v459
    %v461 = vpop.f32.mrb[0].mxu0
    %462 = vmatprep.mubr.f32.mxu0 0.0
    %463 = vmatmul.mubr.f32.gmra.mrb[0].mxu0 %v118
    %v464 = vpop.f32.mrb[0].mxu0
    %v465 = vadd.f32 0.0, %v464
    %v466 = vpop.f32.mrb[0].mxu0
    %467 = vmatprep.mubr.f32.mxu0 0.0
    %468 = vmatmul.mubr.f32.gmra.mrb[0].mxu0 %v119
    %v469 = vpop.f32.mrb[0].mxu0
    %v470 = vadd.f32 0.0, %v469
    %v471 = vpop.f32.mrb[0].mxu0
    %472 = vmatprep.mubr.f32.mxu0 0.0
    %473 = vmatmul.mubr.f32.gmra.mrb[0].mxu0 %v120
    %v474 = vpop.f32.mrb[0].mxu0
    %v475 = vadd.f32 0.0, %v474
    %v476 = vpop.f32.mrb[0].mxu0
    %477 = vmatprep.mubr.f32.mxu0 0.0
    %478 = vmatmul.mubr.f32.gmra.mrb[0].mxu0 %v121
    %v479 = vpop.f32.mrb[0].mxu0
    %v480 = vadd.f32 0.0, %v479
    %v481 = vpop.f32.mrb[0].mxu0
    %482 = vmatprep.mubr.f32.mxu0 0.0
    %483 = vmatmul.mubr.f32.gmra.mrb[0].mxu0 %v122
    %v484 = vpop.f32.mrb[0].mxu0
    %v485 = vadd.f32 0.0, %v484
    %v486 = vpop.f32.mrb[0].mxu0
    %487 = vmatprep.mubr.f32.mxu0 0.0
    %488 = vmatmul.mubr.f32.gmra.mrb[0].mxu0 %v123
    %v489 = vpop.f32.mrb[0].mxu0
    %v490 = vadd.f32 0.0, %v489
    %v491 = vpop.f32.mrb[0].mxu0
    %492 = vmatprep.mubr.f32.mxu0 0.0
    %493 = vmatmul.mubr.f32.gmra.mrb[0].mxu0 %v124
    %v494 = vpop.f32.mrb[0].mxu0
    %v495 = vadd.f32 0.0, %v494
    %v496 = vpop.f32.mrb[0].mxu0
    %497 = vmatprep.mubr.f32.mxu0 0.0
    %498 = vmatmul.mubr.f32.gmra.mrb[0].mxu0 %v125
    %v499 = vpop.f32.mrb[0].mxu0
    %v500 = vadd.f32 0.0, %v499
    %v501 = vpop.f32.mrb[0].mxu0
    %502 = vmatprep.mubr.f32.mxu0 0.0
    %503 = vmatmul.mubr.f32.gmra.mrb[0].mxu0 %v126
    %v504 = vpop.f32.mrb[0].mxu0
    %v505 = vadd.f32 0.0, %v504
    %v506 = vpop.f32.mrb[0].mxu0
    %507 = vmatprep.mubr.f32.mxu0 0.0
    %508 = vmatmul.mubr.f32.gmra.mrb[0].mxu0 %v127
    %v509 = vpop.f32.mrb[0].mxu0
    %v510 = vadd.f32 0.0, %v509
    %v511 = vpop.f32.mrb[0].mxu0
    %512 = vmatprep.mubr.f32.mxu0 0.0
    %513 = vmatmul.mubr.f32.gmra.mrb[0].mxu0 %v128
    %v514 = vpop.f32.mrb[0].mxu0
    %v515 = vadd.f32 0.0, %v514
    %v516 = vpop.f32.mrb[0].mxu0
    %517 = vmatprep.mubr.f32.mxu0 0.0
    %518 = vmatmul.mubr.f32.gmra.mrb[0].mxu0 %v129
    %v519 = vpop.f32.mrb[0].mxu0
    %v520 = vadd.f32 0.0, %v519
    %v521 = vpop.f32.mrb[0].mxu0
    %522 = vmatprep.mubr.f32.mxu0 0.0
    %523 = vmatmul.mubr.f32.gmra.mrb[0].mxu0 %v130
    %v524 = vpop.f32.mrb[0].mxu0
    %v525 = vadd.f32 0.0, %v524
    %v526 = vpop.f32.mrb[0].mxu0
    %527 = vmatprep.mubr.f32.mxu0 0.0
    %528 = vmatmul.mubr.f32.gmra.mrb[0].mxu0 %v131
    %v529 = vpop.f32.mrb[0].mxu0
    %v530 = vadd.f32 0.0, %v529
    %v531 = vpop.f32.mrb[0].mxu0
    %532 = vdwg.mxu0
    %v533 = vmax.f32 %v215, 0.0
    %v534 = vmax.f32 %v220, 0.0
    %v535 = vmax.f32 %v225, 0.0
    %v536 = vmax.f32 %v230, 0.0
    %v537 = vmax.f32 %v235, 0.0
    %v538 = vmax.f32 %v240, 0.0
    %v539 = vmax.f32 %v245, 0.0
    %v540 = vmax.f32 %v250, 0.0
    %v541 = vmax.f32 %v255, 0.0
    %v542 = vmax.f32 %v260, 0.0
    %v543 = vmax.f32 %v265, 0.0
    %v544 = vmax.f32 %v270, 0.0
    %v545 = vmax.f32 %v275, 0.0
    %v546 = vmax.f32 %v280, 0.0
    %v547 = vmax.f32 %v285, 0.0
    %v548 = vmax.f32 %v290, 0.0
    %v549 = vmax.f32 %v295, 0.0
    %v550 = vmax.f32 %v300, 0.0
    %v551 = vmax.f32 %v305, 0.0
    %v552 = vmax.f32 %v310, 0.0
    %v553 = vmax.f32 %v315, 0.0
    %v554 = vmax.f32 %v320, 0.0
    %v555 = vmax.f32 %v325, 0.0
    %v556 = vmax.f32 %v330, 0.0
    %v557 = vmax.f32 %v335, 0.0
    %v558 = vmax.f32 %v340, 0.0
    %v559 = vmax.f32 %v345, 0.0
    %v560 = vmax.f32 %v350, 0.0
    %v561 = vmax.f32 %v355, 0.0
    %v562 = vmax.f32 %v360, 0.0
    %v563 = vmax.f32 %v365, 0.0
    %v564 = vmax.f32 %v370, 0.0
    %v565 = vmax.f32 %v375, 0.0
    %v566 = vmax.f32 %v380, 0.0
    %v567 = vmax.f32 %v385, 0.0
    %v568 = vmax.f32 %v390, 0.0
    %v569 = vmax.f32 %v395, 0.0
    %v570 = vmax.f32 %v400, 0.0
    %v571 = vmax.f32 %v405, 0.0
    %v572 = vmax.f32 %v410, 0.0
    %v573 = vmax.f32 %v415, 0.0
    %v574 = vmax.f32 %v420, 0.0
    %v575 = vmax.f32 %v425, 0.0
    %v576 = vmax.f32 %v430, 0.0
    %v577 = vmax.f32 %v435, 0.0
    %v578 = vmax.f32 %v440, 0.0
    %v579 = vmax.f32 %v445, 0.0
    %v580 = vmax.f32 %v450, 0.0
    %v581 = vmax.f32 %v455, 0.0
    %v582 = vmax.f32 %v460, 0.0
    %v583 = vmax.f32 %v465, 0.0
    %v584 = vmax.f32 %v470, 0.0
    %v585 = vmax.f32 %v475, 0.0
    %v586 = vmax.f32 %v480, 0.0
    %v587 = vmax.f32 %v485, 0.0
    %v588 = vmax.f32 %v490, 0.0
    %v589 = vmax.f32 %v495, 0.0
    %v590 = vmax.f32 %v500, 0.0
    %v591 = vmax.f32 %v505, 0.0
    %v592 = vmax.f32 %v510, 0.0
    %v593 = vmax.f32 %v515, 0.0
    %v594 = vmax.f32 %v520, 0.0
    %v595 = vmax.f32 %v525, 0.0
    %v596 = vmax.f32 %v530, 0.0
    %v597 = vadd.f32 %v533, %v534
    %v598 = vadd.f32 %v597, %v535
    %v599 = vadd.f32 %v598, %v536
    %v600 = vadd.f32 %v599, %v537
    %v601 = vadd.f32 %v600, %v538
    %v602 = vadd.f32 %v601, %v539
    %v603 = vadd.f32 %v602, %v540
    %v604 = vadd.f32 %v603, %v541
    %v605 = vadd.f32 %v604, %v542
    %v606 = vadd.f32 %v605, %v543
    %v607 = vadd.f32 %v606, %v544
    %v608 = vadd.f32 %v607, %v545
    %v609 = vadd.f32 %v608, %v546
    %v610 = vadd.f32 %v609, %v547
    %v611 = vadd.f32 %v610, %v548
    %v612 = vadd.f32 %v611, %v549
    %v613 = vadd.f32 %v612, %v550
    %v614 = vadd.f32 %v613, %v551
    %v615 = vadd.f32 %v614, %v552
    %v616 = vadd.f32 %v615, %v553
    %v617 = vadd.f32 %v616, %v554
    %v618 = vadd.f32 %v617, %v555
    %v619 = vadd.f32 %v618, %v556
    %v620 = vadd.f32 %v619, %v557
    %v621 = vadd.f32 %v620, %v558
    %v622 = vadd.f32 %v621, %v559
    %v623 = vadd.f32 %v622, %v560
    %v624 = vadd.f32 %v623, %v561
    %v625 = vadd.f32 %v624, %v562
    %v626 = vadd.f32 %v625, %v563
    %v627 = vadd.f32 %v626, %v564
    %v628 = vrot.slane %v627, 4
    %v629 = vadd.f32 %v627, %v628
    %v630 = vrot.slane %v629, 2
    %v631 = vadd.f32 %v629, %v630
    %v632 = vrot.slane %v631, 1
    %v633 = vadd.f32 %v631, %v632
    %v634 = vadd.f32 %v565, %v566
    %v635 = vadd.f32 %v634, %v567
    %v636 = vadd.f32 %v635, %v568
    %v637 = vadd.f32 %v636, %v569
    %v638 = vadd.f32 %v637, %v570
    %v639 = vadd.f32 %v638, %v571
    %v640 = vadd.f32 %v639, %v572
    %v641 = vadd.f32 %v640, %v573
    %v642 = vadd.f32 %v641, %v574
    %v643 = vadd.f32 %v642, %v575
    %v644 = vadd.f32 %v643, %v576
    %v645 = vadd.f32 %v644, %v577
    %v646 = vadd.f32 %v645, %v578
    %v647 = vadd.f32 %v646, %v579
    %v648 = vadd.f32 %v647, %v580
    %v649 = vadd.f32 %v648, %v581
    %v650 = vadd.f32 %v649, %v582
    %v651 = vadd.f32 %v650, %v583
    %v652 = vadd.f32 %v651, %v584
    %v653 = vadd.f32 %v652, %v585
    %v654 = vadd.f32 %v653, %v586
    %v655 = vadd.f32 %v654, %v587
    %v656 = vadd.f32 %v655, %v588
    %v657 = vadd.f32 %v656, %v589
    %v658 = vadd.f32 %v657, %v590
    %v659 = vadd.f32 %v658, %v591
    %v660 = vadd.f32 %v659, %v592
    %v661 = vadd.f32 %v660, %v593
    %v662 = vadd.f32 %v661, %v594
    %v663 = vadd.f32 %v662, %v595
    %v664 = vadd.f32 %v663, %v596
    %v665 = vrot.slane %v664, 4
    %v666 = vadd.f32 %v664, %v665
    %v667 = vrot.slane %v666, 2
    %v668 = vadd.f32 %v666, %v667
    %v669 = vrot.slane %v668, 1
    %v670 = vadd.f32 %v668, %v669
    %v671 = vmul.f32 %v633, 0.00390625
    %v672 = vmul.f32 %v670, 0.00390625
    %v673 = vld [vmem:[%s2] sm:$0x1]
    %v675 = vlaneseq
    %v676 = vshrl.u32 %v675, 7
    %v677 = vsub.s32 0, %v676
    %v678 = vrot.slane %v673, %v677
    %v680 = vmul.f32 %v671, %v678
    %v681 = vmul.f32 %v672, %v678
    %v682 = vld [vmem:[%s3] sm:$0x1]
    %v684 = vlaneseq
    %v685 = vshrl.u32 %v684, 7
    %v686 = vsub.s32 0, %v685
    %v687 = vrot.slane %v682, %v686
    %v689 = vadd.f32 %v680, %v687
    %v690 = vadd.f32 %v681, %v687
    %v693 = vrot.slane %v690, 7
    %vm694 = vcmask 1041409
    %v695 = vsel %vm694, %v693, %v689
    %697 = vst [vmem:[#allocation9] sm:$0x3] %v695
    %v698 = vld [vmem:[#allocation7] sm:$0xff]
    %v699 = vld [vmem:[#allocation7 + $0x8] sm:$0xff]
    %v700 = vld [vmem:[#allocation7 + $0x10] sm:$0xff]
    %v701 = vld [vmem:[#allocation7 + $0x18] sm:$0xff]
    %v702 = vld [vmem:[#allocation7 + $0x20] sm:$0xff]
    %v703 = vld [vmem:[#allocation7 + $0x28] sm:$0xff]
    %v704 = vld [vmem:[#allocation7 + $0x30] sm:$0xff]
    %v705 = vld [vmem:[#allocation7 + $0x38] sm:$0xff]
    %v706 = vld [vmem:[#allocation7 + $0x40] sm:$0xff]
    %v707 = vld [vmem:[#allocation7 + $0x48] sm:$0xff]
    %v708 = vld [vmem:[#allocation7 + $0x50] sm:$0xff]
    %v709 = vld [vmem:[#allocation7 + $0x58] sm:$0xff]
    %v710 = vld [vmem:[#allocation7 + $0x60] sm:$0xff]
    %v711 = vld [vmem:[#allocation7 + $0x68] sm:$0xff]
    %v712 = vld [vmem:[#allocation7 + $0x70] sm:$0xff]
    %v713 = vld [vmem:[#allocation7 + $0x78] sm:$0xff]
    %v714 = vld [vmem:[%s5] sm:$0x1]
    %v716 = vlaneseq
    %v717 = vshrl.u32 %v716, 7
    %v718 = vsub.s32 0, %v717
    %v719 = vrot.slane %v714, %v718
    %721 = vmatprep.subr.mxu0 0.0
    %722 = vmatpush1.msra.mxu0 %v698
    %723 = vmatprep.subr.mxu0 0.0
    %724 = vmatpush1.msra.mxu0 %v699
    %725 = vmatprep.subr.mxu0 0.0
    %726 = vmatpush1.msra.mxu0 %v700
    %727 = vmatprep.subr.mxu0 0.0
    %728 = vmatpush1.msra.mxu0 %v701
    %729 = vmatprep.subr.mxu0 0.0
    %730 = vmatpush1.msra.mxu0 %v702
    %731 = vmatprep.subr.mxu0 0.0
    %732 = vmatpush1.msra.mxu0 %v703
    %733 = vmatprep.subr.mxu0 0.0
    %734 = vmatpush1.msra.mxu0 %v704
    %735 = vmatprep.subr.mxu0 0.0
    %736 = vmatpush1.msra.mxu0 %v705
    %737 = vmatprep.subr.mxu0 0.0
    %738 = vmatpush1.msra.mxu0 %v706
    %739 = vmatprep.subr.mxu0 0.0
    %740 = vmatpush1.msra.mxu0 %v707
    %741 = vmatprep.subr.mxu0 0.0
    %742 = vmatpush1.msra.mxu0 %v708
    %743 = vmatprep.subr.mxu0 0.0
    %744 = vmatpush1.msra.mxu0 %v709
    %745 = vmatprep.subr.mxu0 0.0
    %746 = vmatpush1.msra.mxu0 %v710
    %747 = vmatprep.subr.mxu0 0.0
    %748 = vmatpush1.msra.mxu0 %v711
    %749 = vmatprep.subr.mxu0 0.0
    %750 = vmatpush1.msra.mxu0 %v712
    %751 = vmatprep.subr.mxu0 0.0
    %752 = vmatpush1.msra.mxu0 %v713
    %753 = vmatprep.subr.mxu0 0.0
    %754 = vmatpush1.msra.mxu0 0.0
    %755 = vmatprep.subr.mxu0 0.0
    %756 = vmatpush1.msra.mxu0 0.0
    %757 = vmatprep.subr.mxu0 0.0
    %758 = vmatpush1.msra.mxu0 0.0
    %759 = vmatprep.subr.mxu0 0.0
    %760 = vmatpush1.msra.mxu0 0.0
    %761 = vmatprep.subr.mxu0 0.0
    %762 = vmatpush1.msra.mxu0 0.0
    %763 = vmatprep.subr.mxu0 0.0
    %764 = vmatpush1.msra.mxu0 0.0
    %765 = vmatprep.subr.mxu0 0.0
    %766 = vmatpush1.msra.mxu0 0.0
    %767 = vmatprep.subr.mxu0 0.0
    %768 = vmatpush1.msra.mxu0 0.0
    %769 = vmatprep.subr.mxu0 0.0
    %770 = vmatpush1.msra.mxu0 0.0
    %771 = vmatprep.subr.mxu0 0.0
    %772 = vmatpush1.msra.mxu0 0.0
    %773 = vmatprep.subr.mxu0 0.0
    %774 = vmatpush1.msra.mxu0 0.0
    %775 = vmatprep.subr.mxu0 0.0
    %776 = vmatpush1.msra.mxu0 0.0
    %777 = vmatprep.subr.mxu0 0.0
    %778 = vmatpush1.msra.mxu0 0.0
    %779 = vmatprep.subr.mxu0 0.0
    %780 = vmatpush1.msra.mxu0 0.0
    %781 = vmatprep.subr.mxu0 0.0
    %782 = vmatpush1.msra.mxu0 0.0
    %783 = vmatprep.subr.mxu0 0.0
    %784 = vmatpush1.msra.mxu0 0.0
    %785 = vmatprep.mubr.f32.mxu0 0.0
    %786 = vmatmul.mubr.f32.gmra.mrb[0].mxu0 %v695
    %v787 = vpop.f32.mrb[0].mxu0
    %v788 = vadd.f32 %v719, %v787
    %v789 = vpop.f32.mrb[0].mxu0
    %790 = vdwg.mxu0
    %791 = vst [vmem:[#allocation8] sm:$0x3] %v788
    // Predicated region
    $region38: #{tpu_custom_call.1} parent=1 // pred_check
      _
    $region39: #{tpu_custom_call.1} parent=1 // pred_check_branch
      %793 = sbr.rel (0) target = $region41
    $region40: #{tpu_custom_call.1} parent=1 // pred_region
      %s795 = ssub.s32 32, 32
      %796 = vsyncadd [#allocation4], %s795
      %s798 = sshll.u32 [#allocation8], 4
      %s799 = int_to_ptr.vmem [resolvable:$true] %s798
      %801 = dma.vmem_to_hbm [thread:$0]  %s799, 32, %s6, [#allocation4]
    $region41: #{tpu_custom_call.1} parent=1 // pred_fallthru
      _
    // Predicated region
    $region42: #{tpu_custom_call.1} parent=1 // pred_check
      _
    $region43: #{tpu_custom_call.1} parent=1 // pred_check_branch
      %803 = sbr.rel (0) target = $region45
    $region44: #{tpu_custom_call.1} parent=1 // pred_region
      %s805 = ssub.s32 32, 32
      %806 = vsyncadd [#allocation10], %s805
      %s808 = sshll.u32 [#allocation9], 4
      %s809 = int_to_ptr.vmem [resolvable:$true] %s808
      %811 = dma.vmem_to_hbm [thread:$0]  %s809, 32, %s7, [#allocation10]
    $region45: #{tpu_custom_call.1} parent=1 // pred_fallthru
      _
    // Predicated region
    $region46: #{tpu_custom_call.1} parent=1 // pred_check
      _
    $region47: #{tpu_custom_call.1} parent=1 // pred_check_branch
      %813 = sbr.rel (0) target = $region49
    $region48: #{tpu_custom_call.1} parent=1 // pred_region
      %814 = dma.done [#allocation4], 32
    $region49: #{tpu_custom_call.1} parent=1 // pred_fallthru
      _
    // Predicated region
    $region50: #{tpu_custom_call.1} parent=1 // pred_check
      _
    $region51: #{tpu_custom_call.1} parent=1 // pred_check_branch
      %816 = sbr.rel (0) target = $region53
    $region52: #{tpu_custom_call.1} parent=1 // pred_region
      %817 = dma.done [#allocation10], 32
    $region53: #{tpu_custom_call.1} parent=1 // pred_fallthru
      _
    %818 = vsyncpa [#allocation3], 1
    %819 = vsyncpa [#allocation6], 1
    %820 = vsyncpa [#allocation4], 1
    %821 = vsyncpa [#allocation10], 1

</llo_original>
